<compile_context>
chip_gen: v5e
topology: v5e:2x2
jax: 0.10.0
libtpu: 0.0.40
codegen_flags: <defaults>
</compile_context>

<pallas_src>
import math

import jax
import jax.numpy as jnp
from jax import lax
from jax.experimental import pallas as pl
from jax.experimental.pallas import tpu as pltpu


def _critic_kernel(sa_ref, w1_ref, b1_ref, w2_ref, b2_ref, w3_ref, b3_ref, q_ref):
    """One batch tile: q = l3(relu(l2(relu(l1(sa))))) emitted as a (1, TB) row."""
    # Layer 1: single lane-dense matmul (concat already done in the wrapper).
    h1 = jnp.dot(sa_ref[...], w1_ref[...],
                 preferred_element_type=jnp.float32)              # (TB, H1) f32
    h1 = jnp.maximum(h1 + b1_ref[...], 0.0)                       # f32 epilogue

    # Layer 2.
    h2 = jnp.dot(h1.astype(jnp.bfloat16), w2_ref[...],
                 preferred_element_type=jnp.float32)              # (TB, H2) f32
    h2 = jnp.maximum(h2 + b2_ref[...], 0.0)

    # Layer 3 (out_features == 1): contract H2 against the (1, H2) weight row
    # so the result is a lane-dense (1, TB) row -> unmasked full-width stores.
    q = lax.dot_general(w3_ref[...], h2.astype(jnp.bfloat16),
                        dimension_numbers=(((1,), (1,)), ((), ())),
                        preferred_element_type=jnp.float32)       # (1, TB)
    q_ref[...] = (q + b3_ref[...])[None].astype(q_ref.dtype)      # (1, 1, TB)


def _choose_batch_tile(batch, batch_tile):
    """Batch tile: multiple of 8 (or == batch); keep >=2 grid steps on large
    batches so v7x's two TensorCores both get sharded work."""
    tb = min(batch_tile, batch)
    if tb >= batch and batch >= 16:
        tb = -(-batch // 2)               # cdiv(batch, 2): split for 2 TCs
    if tb >= batch:
        return batch                      # tiny batch: one full-extent tile
    tb = ((tb + 7) // 8) * 8              # (8, 128) sublane constraint
    return batch if tb >= batch else tb


def critic_forward(s_list, a_list, params, *, batch_tile=1024):
    """s_list / a_list: lists of (B, dim) arrays. Returns q of shape (B, 1)."""
    xs = list(s_list) + list(a_list)
    # Concatenate once in the wrapper (pure layout plumbing) and cast to bf16:
    # half the streamed bytes, one input DMA per tile, no in-kernel convert.
    sa = jnp.concatenate(xs, axis=1).astype(jnp.bfloat16)         # (B, Din)
    B, d_in = sa.shape

    w1 = params["w1"].astype(jnp.bfloat16)                        # (Din, H1)
    b1 = params["b1"].astype(jnp.float32)                         # (1, H1)
    w2 = params["w2"].astype(jnp.bfloat16)                        # (H1, H2)
    b2 = params["b2"].astype(jnp.float32)                         # (1, H2)
    w3_row = params["w3"].reshape(1, -1).astype(jnp.bfloat16)     # (1, H2)
    b3 = params["b3"].reshape(1, 1).astype(jnp.float32)           # (1, 1)

    tb = _choose_batch_tile(B, batch_tile)
    num_tiles = pl.cdiv(B, tb)

    def _const_spec(arr):
        nd = arr.ndim
        # Constant index_map -> weight/bias blocks stay VMEM-resident across
        # all grid steps (no re-DMA).
        return pl.BlockSpec(arr.shape, lambda i, _nd=nd: (0,) * _nd)

    out = pl.pallas_call(
        _critic_kernel,
        out_shape=jax.ShapeDtypeStruct((num_tiles, 1, tb), jnp.float32),
        grid=(num_tiles,),
        in_specs=[pl.BlockSpec((tb, d_in), lambda i: (i, 0))]
                 + [_const_spec(a) for a in (w1, b1, w2, b2, w3_row, b3)],
        out_specs=pl.BlockSpec((1, 1, tb), lambda i: (i, 0, 0)),
        compiler_params=pltpu.CompilerParams(
            dimension_semantics=("parallel",),
            vmem_limit_bytes=32 * 1024 * 1024),
    )(sa, w1, b1, w2, b2, w3_row, b3)

    # Lane-dense (num_tiles, 1, tb) -> (B, 1). Tail-tile garbage rows (if
    # B % tb != 0) are sliced off here.
    return out.reshape(num_tiles * tb)[:B].reshape(B, 1)


def init_critic_params(key, in_dim, hidden_1=128, hidden_2=128):
    """Deterministic init mimicking nn.Linear default (uniform +-1/sqrt(fan_in)).

    Weights stored transposed relative to PyTorch (in_dim, out_dim) so the
    kernel does x @ W directly; biases kept 2D (1, out) for TPU layout."""
    ks = jax.random.split(key, 6)

    def lin(kw, kb, fan_in, fan_out):
        bound = 1.0 / math.sqrt(fan_in)
        w = jax.random.uniform(kw, (fan_in, fan_out), jnp.float32,
                               minval=-bound, maxval=bound)
        b = jax.random.uniform(kb, (1, fan_out), jnp.float32,
                               minval=-bound, maxval=bound)
        return w, b

    w1, b1 = lin(ks[0], ks[1], in_dim, hidden_1)
    w2, b2 = lin(ks[2], ks[3], hidden_1, hidden_2)
    w3, b3 = lin(ks[4], ks[5], hidden_2, 1)
    return {"w1": w1, "b1": b1, "w2": w2, "b2": b2, "w3": w3, "b3": b3}


if __name__ == "__main__":
    key = jax.random.PRNGKey(0)

    # dim_info = {"agent_0": [obs=10, act=5], "agent_1": [obs=12, act=5]}
    dim_info = {"agent_0": [10, 5], "agent_1": [12, 5]}
    global_obs_act_dim = sum(sum(v) for v in dim_info.values())   # 32
    B = 20   # with batch_tile=8 exercises a 3-step grid + partial tail tile

    k_param, k_s0, k_s1, k_a0, k_a1 = jax.random.split(key, 5)
    params = init_critic_params(k_param, global_obs_act_dim,
                                hidden_1=128, hidden_2=128)

    s_list = [
        jax.random.normal(k_s0, (B, dim_info["agent_0"][0]), jnp.float32),
        jax.random.normal(k_s1, (B, dim_info["agent_1"][0]), jnp.float32),
    ]
    a_list = [
        jax.random.normal(k_a0, (B, dim_info["agent_0"][1]), jnp.float32),
        jax.random.normal(k_a1, (B, dim_info["agent_1"][1]), jnp.float32),
    ]

    q = critic_forward(s_list, a_list, params, batch_tile=8)
    q = jax.block_until_ready(q)

    # Also exercise the default-tile path (2-step grid on this B).
    q2 = jax.block_until_ready(critic_forward(s_list, a_list, params))

    # Pure-JAX f32 reference (kernel uses bf16 MXU operands -> loose tolerance).
    sa = jnp.concatenate(s_list + a_list, axis=1)
    h1 = jnp.maximum(sa @ params["w1"] + params["b1"], 0.0)
    h2 = jnp.maximum(h1 @ params["w2"] + params["b2"], 0.0)
    q_ref = h2 @ params["w3"] + params["b3"]

    assert q.shape == (B, 1)
    assert jnp.allclose(q, q_ref, atol=3e-2, rtol=3e-2), \
        float(jnp.max(jnp.abs(q - q_ref)))
    assert jnp.allclose(q2, q_ref, atol=3e-2, rtol=3e-2), \
        float(jnp.max(jnp.abs(q2 - q_ref)))

    print("KERNEL_OK")
</pallas_src>

<mosaic_0001>
module attributes {stable_mosaic.version = 11 : i64} {
  func.func @_critic_kernel(%arg0: i32, %arg1: memref<8x32xbf16, #tpu.memory_space<vmem>>, %arg2: memref<32x128xbf16, #tpu.memory_space<vmem>>, %arg3: memref<1x128xf32, #tpu.memory_space<vmem>>, %arg4: memref<128x128xbf16, #tpu.memory_space<vmem>>, %arg5: memref<1x128xf32, #tpu.memory_space<vmem>>, %arg6: memref<1x128xbf16, #tpu.memory_space<vmem>>, %arg7: memref<1x1xf32, #tpu.memory_space<vmem>>, %arg8: memref<1x1x8xf32, #tpu.memory_space<vmem>>) attributes {dimension_semantics = [#tpu.dimension_semantics<parallel>], iteration_bounds = array<i64: 3>, scalar_prefetch = 0 : i64, scratch_operands = 0 : i64, tpu.core_type = #tpu.core_type<tc>, window_params = [{transform_indices = @transform_0, window_bounds = array<i64: 8, 32>}, {pipeline_mode = #tpu.pipeline_mode<synchronous>, transform_indices = @transform_1, window_bounds = array<i64: 32, 128>}, {pipeline_mode = #tpu.pipeline_mode<synchronous>, transform_indices = @transform_2, window_bounds = array<i64: 1, 128>}, {pipeline_mode = #tpu.pipeline_mode<synchronous>, transform_indices = @transform_3, window_bounds = array<i64: 128, 128>}, {pipeline_mode = #tpu.pipeline_mode<synchronous>, transform_indices = @transform_4, window_bounds = array<i64: 1, 128>}, {pipeline_mode = #tpu.pipeline_mode<synchronous>, transform_indices = @transform_5, window_bounds = array<i64: 1, 128>}, {pipeline_mode = #tpu.pipeline_mode<synchronous>, transform_indices = @transform_6, window_bounds = array<i64: 1, 1>}, {transform_indices = @transform_7, window_bounds = array<i64: 1, 1, 8>}]} {
    %c0 = arith.constant 0 : index
    %c0_0 = arith.constant 0 : index
    %0 = vector.load %arg1[%c0, %c0_0] : memref<8x32xbf16, #tpu.memory_space<vmem>>, vector<8x32xbf16>
    %c0_1 = arith.constant 0 : index
    %c0_2 = arith.constant 0 : index
    %1 = vector.load %arg2[%c0_1, %c0_2] : memref<32x128xbf16, #tpu.memory_space<vmem>>, vector<32x128xbf16>
    %cst = arith.constant dense<0.000000e+00> : vector<8x128xf32>
    %2 = tpu.matmul %0, %1, %cst {dimension_numbers = #tpu.dot_dimension_numbers<[1], [0], [0], [1], [0, 0, 1, 1], [], []>} : vector<8x32xbf16>, vector<32x128xbf16>, vector<8x128xf32> -> vector<8x128xf32>
    %c0_3 = arith.constant 0 : index
    %c0_4 = arith.constant 0 : index
    %3 = vector.load %arg3[%c0_3, %c0_4] : memref<1x128xf32, #tpu.memory_space<vmem>>, vector<1x128xf32>
    %4 = vector.broadcast %3 : vector<1x128xf32> to vector<8x128xf32>
    %5 = arith.addf %2, %4 : vector<8x128xf32>
    %cst_5 = arith.constant 0.000000e+00 : f32
    %6 = vector.broadcast %cst_5 : f32 to vector<8x128xf32>
    %7 = arith.maximumf %5, %6 : vector<8x128xf32>
    %8 = arith.truncf %7 : vector<8x128xf32> to vector<8x128xbf16>
    %c0_6 = arith.constant 0 : index
    %c0_7 = arith.constant 0 : index
    %9 = vector.load %arg4[%c0_6, %c0_7] : memref<128x128xbf16, #tpu.memory_space<vmem>>, vector<128x128xbf16>
    %cst_8 = arith.constant dense<0.000000e+00> : vector<8x128xf32>
    %10 = tpu.matmul %8, %9, %cst_8 {dimension_numbers = #tpu.dot_dimension_numbers<[1], [0], [0], [1], [0, 0, 1, 1], [], []>} : vector<8x128xbf16>, vector<128x128xbf16>, vector<8x128xf32> -> vector<8x128xf32>
    %c0_9 = arith.constant 0 : index
    %c0_10 = arith.constant 0 : index
    %11 = vector.load %arg5[%c0_9, %c0_10] : memref<1x128xf32, #tpu.memory_space<vmem>>, vector<1x128xf32>
    %12 = vector.broadcast %11 : vector<1x128xf32> to vector<8x128xf32>
    %13 = arith.addf %10, %12 : vector<8x128xf32>
    %cst_11 = arith.constant 0.000000e+00 : f32
    %14 = vector.broadcast %cst_11 : f32 to vector<8x128xf32>
    %15 = arith.maximumf %13, %14 : vector<8x128xf32>
    %c0_12 = arith.constant 0 : index
    %c0_13 = arith.constant 0 : index
    %16 = vector.load %arg6[%c0_12, %c0_13] : memref<1x128xbf16, #tpu.memory_space<vmem>>, vector<1x128xbf16>
    %17 = arith.truncf %15 : vector<8x128xf32> to vector<8x128xbf16>
    %cst_14 = arith.constant dense<0.000000e+00> : vector<1x8xf32>
    %18 = tpu.matmul %16, %17, %cst_14 {dimension_numbers = #tpu.dot_dimension_numbers<[1], [1], [0], [0], [0, 0, 1, 0], [], []>} : vector<1x128xbf16>, vector<8x128xbf16>, vector<1x8xf32> -> vector<1x8xf32>
    %c0_15 = arith.constant 0 : index
    %c0_16 = arith.constant 0 : index
    %19 = vector.load %arg7[%c0_15, %c0_16] : memref<1x1xf32, #tpu.memory_space<vmem>>, vector<1x1xf32>
    %20 = vector.broadcast %19 : vector<1x1xf32> to vector<1x8xf32>
    %21 = arith.addf %18, %20 : vector<1x8xf32>
    %22 = vector.shape_cast %21 : vector<1x8xf32> to vector<1x1x8xf32>
    %c0_17 = arith.constant 0 : index
    %c0_18 = arith.constant 0 : index
    %c0_19 = arith.constant 0 : index
    %23 = vector.load %arg8[%c0_17, %c0_18, %c0_19] : memref<1x1x8xf32, #tpu.memory_space<vmem>>, vector<1x1x8xf32>
    tpu.vector_store %arg8[%c0_17, %c0_18, %c0_19], %22 {strides = array<i32>} : memref<1x1x8xf32, #tpu.memory_space<vmem>>, vector<1x1x8xf32>,
    return
  }
  func.func @transform_0(%arg0: i32) -> (i32, i32) {
    %c0_i32 = arith.constant 0 : i32
    %c0_i32_0 = arith.constant 0 : i32
    return %arg0, %c0_i32 : i32, i32
  }
  func.func @transform_1(%arg0: i32) -> (i32, i32) {
    %c0_i32 = arith.constant 0 : i32
    %c0_i32_0 = arith.constant 0 : i32
    %c0_i32_1 = arith.constant 0 : i32
    return %c0_i32, %c0_i32_0 : i32, i32
  }
  func.func @transform_2(%arg0: i32) -> (i32, i32) {
    %c0_i32 = arith.constant 0 : i32
    %c0_i32_0 = arith.constant 0 : i32
    %c0_i32_1 = arith.constant 0 : i32
    return %c0_i32, %c0_i32_0 : i32, i32
  }
  func.func @transform_3(%arg0: i32) -> (i32, i32) {
    %c0_i32 = arith.constant 0 : i32
    %c0_i32_0 = arith.constant 0 : i32
    %c0_i32_1 = arith.constant 0 : i32
    return %c0_i32, %c0_i32_0 : i32, i32
  }
  func.func @transform_4(%arg0: i32) -> (i32, i32) {
    %c0_i32 = arith.constant 0 : i32
    %c0_i32_0 = arith.constant 0 : i32
    %c0_i32_1 = arith.constant 0 : i32
    return %c0_i32, %c0_i32_0 : i32, i32
  }
  func.func @transform_5(%arg0: i32) -> (i32, i32) {
    %c0_i32 = arith.constant 0 : i32
    %c0_i32_0 = arith.constant 0 : i32
    %c0_i32_1 = arith.constant 0 : i32
    return %c0_i32, %c0_i32_0 : i32, i32
  }
  func.func @transform_6(%arg0: i32) -> (i32, i32) {
    %c0_i32 = arith.constant 0 : i32
    %c0_i32_0 = arith.constant 0 : i32
    %c0_i32_1 = arith.constant 0 : i32
    return %c0_i32, %c0_i32_0 : i32, i32
  }
  func.func @transform_7(%arg0: i32) -> (i32, i32, i32) {
    %c0_i32 = arith.constant 0 : i32
    %c0_i32_0 = arith.constant 0 : i32
    %c0_i32_1 = arith.constant 0 : i32
    return %arg0, %c0_i32, %c0_i32_0 : i32, i32, i32
  }
}

</mosaic_0001>

<llo_original>
// kernel: tpu_custom_call.1
$region0: #{tpu_custom_call.1}
  #allocation0 [shape = 'u32[]', space=smem, size = 0x4, offset = 0x4, fixed_abs, tag = 'smem constant byte address 0x4 - core index']
  #allocation1 [shape = 'u32[72,128]{1,0:T(1,128)}', space=vmem, size = 0x9000, scoped, tag = 'internal scratch']
  #allocation2 [shape = 'f32[1,1]{1,0:T(1,128)S(1)}', space=vmem, size = 0x200, scoped, tag = 'scoped memory for tpu_custom_call.1']
  %s0 = inlined_call_operand.hbm [shape: bf16[20,32], index: 0, kind: input, shape index: {}]
  %s1 = inlined_call_operand.hbm [shape: bf16[32,128], index: 1, kind: input, shape index: {}]
  %s2 = inlined_call_operand.vmem [shape: f32[1,128], index: 2, kind: input, shape index: {}]
  %s3 = inlined_call_operand.hbm [shape: bf16[128,128], index: 3, kind: input, shape index: {}]
  %s4 = inlined_call_operand.vmem [shape: f32[1,128], index: 4, kind: input, shape index: {}]
  %s5 = inlined_call_operand.vmem [shape: bf16[1,128], index: 5, kind: input, shape index: {}]
  %s6 = inlined_call_operand.<no memory space> [shape: f32[1,1], index: 6, kind: input, shape index: {}]
  %s7 = inlined_call_operand.hbm [shape: f32[3,1,8], index: 7, kind: output, shape index: {}]
  %s8 = sld [smem:[#allocation0]]
  $region73: #{tpu_custom_call.1} parent=0
    _
  %s10 = ssub.s32 1, %s8
  %s11 = scalar_select 0, %s10, %s8
  %v12 = vstv %s6
  %13 = vst [vmem:[#allocation2] sm:$0x1] %v12
  $region1: #{tpu_custom_call.1} parent=0
    #allocation3 [shape = 'u8[4096]{0}', space=vmem, size = 0x1000, scoped, tag = 'input window, operand 0']
    #allocation4 [shape = 's32[2]{0}', space=sflag, size = 0x8, scoped, tag = 'scoped memory for tpu_custom_call.1']
    #allocation5 [shape = 's32[2]{0}', space=sflag, size = 0x8, scoped, tag = 'scoped memory for tpu_custom_call.1']
    #allocation6 [shape = 'u8[8192]{0}', space=vmem, size = 0x2000, scoped, tag = 'input window, operand 1, single buffered']
    #allocation7 [shape = 's32[1]{0}', space=sflag, size = 0x4, scoped, tag = 'scoped memory for tpu_custom_call.1']
    #allocation8 [shape = 'u8[32768]{0}', space=vmem, size = 0x8000, scoped, tag = 'input window, operand 3, single buffered']
    #allocation9 [shape = 'u8[1024]{0}', space=vmem, size = 0x400, scoped, tag = 'output window, operand 0']
    %14 = vsyncpa [#allocation4], 0
    %s15 = scalar_lea.sflag [#allocation4], 1
    %16 = vsyncpa %s15, 0
    %17 = vsyncpa [#allocation7], 0
    %18 = vsyncpa [#allocation5], 0
    %s19 = scalar_lea.sflag [#allocation5], 1
    %20 = vsyncpa %s19, 0
    loop: start=0, step=1, limit=5
    $region2: #{tpu_custom_call.1} parent=1 // loop_pre_header
      _
    $region3: #{tpu_custom_call.1} parent=1 // loop_header
      %s22 = sphi 0, %s26
      %p23 = scmp.ge.s32.totalorder %s22, 5
      %s32 = sphi 0, %s34
      %s35 = sphi 0, %s32
      %s36 = sphi 0, %s35
      %s52 = sphi 0, %s36
      %s56 = sphi 0, %s56
      %s58 = sphi 0, %s56
      %s59 = sphi 0, %s58
      %s73 = sphi 0, %s59
      %s77 = sphi 0, %s77
      %s79 = sphi 0, %s77
      %s80 = sphi 0, %s79
      %s94 = sphi 0, %s80
      %s98 = sphi 0, %s98
      %s100 = sphi 0, %s98
      %s101 = sphi 0, %s100
      %s115 = sphi 0, %s101
      %s119 = sphi 0, %s119
      %s121 = sphi 0, %s119
      %s122 = sphi 0, %s121
      %s136 = sphi 0, %s122
      %s140 = sphi 0, %s140
      %s142 = sphi 0, %s140
      %s143 = sphi 0, %s142
      %s157 = sphi 0, %s143
      %s161 = sphi 0, %s161
      %s163 = sphi 0, %s161
      %s164 = sphi 0, %s163
      %s178 = sphi 0, %s164
      %s184 = sphi 0, %s186
      %s187 = sphi 0, %s184
      %s188 = sphi 0, %s187
      %s204 = sphi 0, %s188
    $region4: #{tpu_custom_call.1} parent=1 // loop_header_branch
      %25 = sbr.rel (%p23) target = $region8
    $region5: #{tpu_custom_call.1} parent=1 // loop_body
      %s27 = ssub.s32 %s22, 1
      %s28 = ssub.s32 %s22, 2
      %s29 = sadd.s32 %s22, 1
      %s30 = ssub.s32 %s22, %s29
      %p31 = scmp.eq.s32.totalorder %s30, 0
      %s33 = sadd.s32 %s32, 1
      %s34 = scalar_select %p31, %s32, %s33
      %p37 = pneg %p31
      %p38 = scmp.eq.s32.totalorder %s22, 2
      %p39 = por %p37, %p38
      %p40 = scmp.ne.s32.totalorder %s32, %s35
      %p41 = scmp.eq.s32.totalorder %s22, 0
      %p42 = por %p40, %p41
      %p43 = scmp.ne.s32.totalorder %s32, %s35
      %p44 = scmp.eq.s32.totalorder %s27, 2
      %p45 = por %p43, %p44
      %p46 = scmp.ne.s32.totalorder %s35, %s36
      %p47 = scmp.eq.s32.totalorder %s27, 0
      %p48 = por %p46, %p47
      %p49 = scmp.ne.s32.totalorder %s35, %s36
      %p50 = scmp.eq.s32.totalorder %s28, 2
      %p51 = por %p49, %p50
      %p53 = scmp.ne.s32.totalorder %s36, %s52
      %p54 = scmp.eq.s32.totalorder %s28, 0
      %p55 = por %p53, %p54
      %s57 = sadd.s32 %s56, 1
      %p60 = scmp.eq.s32.totalorder %s22, 2
      %p61 = scmp.ne.s32.totalorder %s56, %s58
      %p62 = scmp.eq.s32.totalorder %s22, 0
      %p63 = por %p61, %p62
      %p64 = scmp.ne.s32.totalorder %s56, %s58
      %p65 = scmp.eq.s32.totalorder %s27, 2
      %p66 = por %p64, %p65
      %p67 = scmp.ne.s32.totalorder %s58, %s59
      %p68 = scmp.eq.s32.totalorder %s27, 0
      %p69 = por %p67, %p68
      %p70 = scmp.ne.s32.totalorder %s58, %s59
      %p71 = scmp.eq.s32.totalorder %s28, 2
      %p72 = por %p70, %p71
      %p74 = scmp.ne.s32.totalorder %s59, %s73
      %p75 = scmp.eq.s32.totalorder %s28, 0
      %p76 = por %p74, %p75
      %s78 = sadd.s32 %s77, 1
      %p81 = scmp.eq.s32.totalorder %s22, 2
      %p82 = scmp.ne.s32.totalorder %s77, %s79
      %p83 = scmp.eq.s32.totalorder %s22, 0
      %p84 = por %p82, %p83
      %p85 = scmp.ne.s32.totalorder %s77, %s79
      %p86 = scmp.eq.s32.totalorder %s27, 2
      %p87 = por %p85, %p86
      %p88 = scmp.ne.s32.totalorder %s79, %s80
      %p89 = scmp.eq.s32.totalorder %s27, 0
      %p90 = por %p88, %p89
      %p91 = scmp.ne.s32.totalorder %s79, %s80
      %p92 = scmp.eq.s32.totalorder %s28, 2
      %p93 = por %p91, %p92
      %p95 = scmp.ne.s32.totalorder %s80, %s94
      %p96 = scmp.eq.s32.totalorder %s28, 0
      %p97 = por %p95, %p96
      %s99 = sadd.s32 %s98, 1
      %p102 = scmp.eq.s32.totalorder %s22, 2
      %p103 = scmp.ne.s32.totalorder %s98, %s100
      %p104 = scmp.eq.s32.totalorder %s22, 0
      %p105 = por %p103, %p104
      %p106 = scmp.ne.s32.totalorder %s98, %s100
      %p107 = scmp.eq.s32.totalorder %s27, 2
      %p108 = por %p106, %p107
      %p109 = scmp.ne.s32.totalorder %s100, %s101
      %p110 = scmp.eq.s32.totalorder %s27, 0
      %p111 = por %p109, %p110
      %p112 = scmp.ne.s32.totalorder %s100, %s101
      %p113 = scmp.eq.s32.totalorder %s28, 2
      %p114 = por %p112, %p113
      %p116 = scmp.ne.s32.totalorder %s101, %s115
      %p117 = scmp.eq.s32.totalorder %s28, 0
      %p118 = por %p116, %p117
      %s120 = sadd.s32 %s119, 1
      %p123 = scmp.eq.s32.totalorder %s22, 2
      %p124 = scmp.ne.s32.totalorder %s119, %s121
      %p125 = scmp.eq.s32.totalorder %s22, 0
      %p126 = por %p124, %p125
      %p127 = scmp.ne.s32.totalorder %s119, %s121
      %p128 = scmp.eq.s32.totalorder %s27, 2
      %p129 = por %p127, %p128
      %p130 = scmp.ne.s32.totalorder %s121, %s122
      %p131 = scmp.eq.s32.totalorder %s27, 0
      %p132 = por %p130, %p131
      %p133 = scmp.ne.s32.totalorder %s121, %s122
      %p134 = scmp.eq.s32.totalorder %s28, 2
      %p135 = por %p133, %p134
      %p137 = scmp.ne.s32.totalorder %s122, %s136
      %p138 = scmp.eq.s32.totalorder %s28, 0
      %p139 = por %p137, %p138
      %s141 = sadd.s32 %s140, 1
      %p144 = scmp.eq.s32.totalorder %s22, 2
      %p145 = scmp.ne.s32.totalorder %s140, %s142
      %p146 = scmp.eq.s32.totalorder %s22, 0
      %p147 = por %p145, %p146
      %p148 = scmp.ne.s32.totalorder %s140, %s142
      %p149 = scmp.eq.s32.totalorder %s27, 2
      %p150 = por %p148, %p149
      %p151 = scmp.ne.s32.totalorder %s142, %s143
      %p152 = scmp.eq.s32.totalorder %s27, 0
      %p153 = por %p151, %p152
      %p154 = scmp.ne.s32.totalorder %s142, %s143
      %p155 = scmp.eq.s32.totalorder %s28, 2
      %p156 = por %p154, %p155
      %p158 = scmp.ne.s32.totalorder %s143, %s157
      %p159 = scmp.eq.s32.totalorder %s28, 0
      %p160 = por %p158, %p159
      %s162 = sadd.s32 %s161, 1
      %p165 = scmp.eq.s32.totalorder %s22, 2
      %p166 = scmp.ne.s32.totalorder %s161, %s163
      %p167 = scmp.eq.s32.totalorder %s22, 0
      %p168 = por %p166, %p167
      %p169 = scmp.ne.s32.totalorder %s161, %s163
      %p170 = scmp.eq.s32.totalorder %s27, 2
      %p171 = por %p169, %p170
      %p172 = scmp.ne.s32.totalorder %s163, %s164
      %p173 = scmp.eq.s32.totalorder %s27, 0
      %p174 = por %p172, %p173
      %p175 = scmp.ne.s32.totalorder %s163, %s164
      %p176 = scmp.eq.s32.totalorder %s28, 2
      %p177 = por %p175, %p176
      %p179 = scmp.ne.s32.totalorder %s164, %s178
      %p180 = scmp.eq.s32.totalorder %s28, 0
      %p181 = por %p179, %p180
      %s182 = ssub.s32 %s22, %s29
      %p183 = scmp.eq.s32.totalorder %s182, 0
      %s185 = sadd.s32 %s184, 1
      %s186 = scalar_select %p183, %s184, %s185
      %p189 = pneg %p183
      %p190 = scmp.eq.s32.totalorder %s22, 2
      %p191 = por %p189, %p190
      %p192 = scmp.ne.s32.totalorder %s184, %s187
      %p193 = scmp.eq.s32.totalorder %s22, 0
      %p194 = por %p192, %p193
      %p195 = scmp.ne.s32.totalorder %s184, %s187
      %p196 = scmp.eq.s32.totalorder %s27, 2
      %p197 = por %p195, %p196
      %p198 = scmp.ne.s32.totalorder %s187, %s188
      %p199 = scmp.eq.s32.totalorder %s27, 0
      %p200 = por %p198, %p199
      %p201 = scmp.ne.s32.totalorder %s187, %s188
      %p202 = scmp.eq.s32.totalorder %s28, 2
      %p203 = por %p201, %p202
      %p205 = scmp.ne.s32.totalorder %s188, %s204
      %p206 = scmp.eq.s32.totalorder %s28, 0
      %p207 = por %p205, %p206
      %p208 = scmp.le.s32.totalorder 1, %s22
      %p209 = scmp.lt.s32.totalorder %s22, 4
      %p210 = pnand %p208, %p209
      %p211 = pneg %p210
      // Predicated region
      $region9: #{tpu_custom_call.1} parent=5 // pred_check
        _
      $region10: #{tpu_custom_call.1} parent=5 // pred_check_branch
        %213 = sbr.rel (%p210) target = $region12
      $region11: #{tpu_custom_call.1} parent=5 // pred_region
        %s214 = ssub.s32 %s22, 1
        // Predicated region
        $region13: #{tpu_custom_call.1} parent=11 // pred_check
          %p215 = pneg %p69
        $region14: #{tpu_custom_call.1} parent=11 // pred_check_branch
          %217 = sbr.rel (%p215) target = $region16
        $region15: #{tpu_custom_call.1} parent=11 // pred_region
          %219 = vsyncadd [#allocation7], 0
          %s220 = sshll.u32 %s1, 4
          %s221 = int_to_ptr.hbm [resolvable:$true] %s220
          %s222 = sshll.u32 [#allocation6], 4
          %s223 = int_to_ptr.vmem [resolvable:$true] %s222
          %228 = dma.hbm_to_vmem [thread:$0]  %s221, 256, %s223, [#allocation7], 64, 64, 4
        $region16: #{tpu_custom_call.1} parent=11 // pred_fallthru
          _
        // Predicated region
        $region17: #{tpu_custom_call.1} parent=11 // pred_check
          %p229 = pneg %p90
        $region18: #{tpu_custom_call.1} parent=11 // pred_check_branch
          %231 = sbr.rel (%p229) target = $region20
        $region19: #{tpu_custom_call.1} parent=11 // pred_region
          _
        $region20: #{tpu_custom_call.1} parent=11 // pred_fallthru
          _
        // Predicated region
        $region21: #{tpu_custom_call.1} parent=11 // pred_check
          %p232 = pneg %p111
        $region22: #{tpu_custom_call.1} parent=11 // pred_check_branch
          %234 = sbr.rel (%p232) target = $region24
        $region23: #{tpu_custom_call.1} parent=11 // pred_region
          %236 = vsyncadd [#allocation7], 0
          %s237 = sshll.u32 %s3, 4
          %s238 = int_to_ptr.hbm [resolvable:$true] %s237
          %s239 = sshll.u32 [#allocation8], 4
          %s240 = int_to_ptr.vmem [resolvable:$true] %s239
          %245 = dma.hbm_to_vmem [thread:$0]  %s238, 1024, %s240, [#allocation7], 64, 64, 4
        $region24: #{tpu_custom_call.1} parent=11 // pred_fallthru
          _
        // Predicated region
        $region25: #{tpu_custom_call.1} parent=11 // pred_check
          %p246 = pneg %p132
        $region26: #{tpu_custom_call.1} parent=11 // pred_check_branch
          %248 = sbr.rel (%p246) target = $region28
        $region27: #{tpu_custom_call.1} parent=11 // pred_region
          _
        $region28: #{tpu_custom_call.1} parent=11 // pred_fallthru
          _
        // Predicated region
        $region29: #{tpu_custom_call.1} parent=11 // pred_check
          %p249 = pneg %p153
        $region30: #{tpu_custom_call.1} parent=11 // pred_check_branch
          %251 = sbr.rel (%p249) target = $region32
        $region31: #{tpu_custom_call.1} parent=11 // pred_region
          _
        $region32: #{tpu_custom_call.1} parent=11 // pred_fallthru
          _
        // Predicated region
        $region33: #{tpu_custom_call.1} parent=11 // pred_check
          %p252 = pneg %p174
        $region34: #{tpu_custom_call.1} parent=11 // pred_check_branch
          %254 = sbr.rel (%p252) target = $region36
        $region35: #{tpu_custom_call.1} parent=11 // pred_region
          _
        $region36: #{tpu_custom_call.1} parent=11 // pred_fallthru
          _
      $region12: #{tpu_custom_call.1} parent=5 // pred_fallthru
        _
      %p255 = scmp.lt.s32.totalorder %s22, 3
      // Predicated region
      $region37: #{tpu_custom_call.1} parent=5 // pred_check
        %p256 = pneg %p255
      $region38: #{tpu_custom_call.1} parent=5 // pred_check_branch
        %258 = sbr.rel (%p256) target = $region40
      $region39: #{tpu_custom_call.1} parent=5 // pred_region
        // Predicated region
        $region41: #{tpu_custom_call.1} parent=39 // pred_check
          %p259 = pneg %p42
        $region42: #{tpu_custom_call.1} parent=39 // pred_check_branch
          %261 = sbr.rel (%p259) target = $region44
        $region43: #{tpu_custom_call.1} parent=39 // pred_region
          %s262 = sand.u32 %s32, 1
          %s263 = scalar_lea.sflag [#allocation4], %s262
          %s264 = sand.u32 %s32, 1
          %s265 = smul.addr %s264, 4
          %s266 = scalar_lea.vmem [#allocation3], %s265
          %268 = vsyncadd %s263, 0
          %s269 = smul.addr %s22, 4
          %s270 = scalar_lea.hbm %s0, %s269
          %s272 = sshll.u32 %s270, 4
          %s273 = int_to_ptr.hbm [resolvable:$true] %s272
          %s274 = sshll.u32 %s266, 4
          %s275 = int_to_ptr.vmem [resolvable:$true] %s274
          %277 = dma.hbm_to_vmem [thread:$0]  %s273, 64, %s275, %s263
        $region44: #{tpu_custom_call.1} parent=39 // pred_fallthru
          _
      $region40: #{tpu_custom_call.1} parent=5 // pred_fallthru
        _
      %p278 = scmp.le.s32.totalorder 1, %s22
      %p279 = scmp.lt.s32.totalorder %s22, 4
      %p280 = pnand %p278, %p279
      %p281 = pneg %p280
      // Predicated region
      $region45: #{tpu_custom_call.1} parent=5 // pred_check
        _
      $region46: #{tpu_custom_call.1} parent=5 // pred_check_branch
        %283 = sbr.rel (%p280) target = $region48
      $region47: #{tpu_custom_call.1} parent=5 // pred_region
        %s284 = ssub.s32 %s22, 1
        %s285 = sand.u32 %s35, 1
        %s286 = scalar_lea.sflag [#allocation4], %s285
        %s287 = sand.u32 %s35, 1
        %s288 = smul.addr %s287, 4
        %s289 = scalar_lea.vmem [#allocation3], %s288
        // Predicated region
        $region49: #{tpu_custom_call.1} parent=47 // pred_check
          %p290 = pneg %p48
        $region50: #{tpu_custom_call.1} parent=47 // pred_check_branch
          %292 = sbr.rel (%p290) target = $region52
        $region51: #{tpu_custom_call.1} parent=47 // pred_region
          %294 = dma.done %s286, 64
        $region52: #{tpu_custom_call.1} parent=47 // pred_fallthru
          _
        // Predicated region
        $region53: #{tpu_custom_call.1} parent=47 // pred_check
          %p295 = pneg %p69
        $region54: #{tpu_custom_call.1} parent=47 // pred_check_branch
          %297 = sbr.rel (%p295) target = $region56
        $region55: #{tpu_custom_call.1} parent=47 // pred_region
          %299 = dma.done [#allocation7], 256
        $region56: #{tpu_custom_call.1} parent=47 // pred_fallthru
          _
        // Predicated region
        $region57: #{tpu_custom_call.1} parent=47 // pred_check
          %p300 = pneg %p111
        $region58: #{tpu_custom_call.1} parent=47 // pred_check_branch
          %302 = sbr.rel (%p300) target = $region60
        $region59: #{tpu_custom_call.1} parent=47 // pred_region
          %304 = dma.done [#allocation7], 1024
        $region60: #{tpu_custom_call.1} parent=47 // pred_fallthru
          _
        %s305 = sand.u32 %s35, 1
        %s306 = scalar_lea.sflag [#allocation4], %s305
        %s307 = sand.u32 %s35, 1
        %s308 = smul.addr %s307, 4
        %s309 = scalar_lea.vmem [#allocation3], %s308
        %p310 = pneg %p48
        %p311 = pneg %p45
        %p312 = pneg %p69
        %p313 = pneg %p66
        %p314 = pneg %p90
        %p315 = pneg %p87
        %p316 = pneg %p111
        %p317 = pneg %p108
        %p318 = pneg %p132
        %p319 = pneg %p129
        %p320 = pneg %p153
        %p321 = pneg %p150
        %p322 = pneg %p174
        %p323 = pneg %p171
        %p324 = pneg %p200
        %p325 = pneg %p197
        %s326 = sand.u32 %s187, 1
        %s327 = scalar_lea.sflag [#allocation5], %s326
        %s328 = sand.u32 %s187, 1
        %s329 = scalar_lea.vmem [#allocation9], %s328
        %v331 = vld [vmem:[%s289] sm:$0xf]
        %v332 = vld [vmem:[#allocation6] sm:$0xf]
        %v333 = vld [vmem:[#allocation6 + $0x4] sm:$0xf]
        %v334 = vld [vmem:[#allocation6 + $0x8] sm:$0xf]
        %v335 = vld [vmem:[#allocation6 + $0xc] sm:$0xf]
        %v336 = vld [vmem:[%s2] sm:$0x1]
        %v338 = vperm.slane %v336, 0
        %v344 = vunpack.c.l.b16 %v332
        %v345 = vunpack.c.l.b16 %v333
        %v346 = vunpack.c.l.b16 %v334
        %v347 = vunpack.c.l.b16 %v335
        %v348 = vpack.c.b16 %v345, %v344
        %v349 = vpack.c.b16 %v347, %v346
        %vm352 = vcmask 261120
        %v354 = vsel %vm352, %v331, 0
        %356 = vmatpush.bf16.msra.mxu0 0
        %357 = vmatpush.bf16.msra.mxu0 0
        %358 = vmatpush.bf16.msra.mxu0 0
        %359 = vmatpush.bf16.msra.mxu0 0
        %360 = vmatpush.bf16.msra.mxu0 0
        %361 = vmatpush.bf16.msra.mxu0 0
        %362 = vmatpush.bf16.msra.mxu0 %v349
        %363 = vmatpush.bf16.msra.mxu0 %v348
        %364 = vmatmul.bf16.gmra.mxu0 %v354
        %v365 = vpop.f32.mrf.mxu0
        %v366 = vadd.f32 %v338, %v365
        %v367 = vpop.f32.mrf.mxu0
        %368 = vdwg.mxu0
        %v369 = vmax.f32 %v366, 0.0
        %v370 = vpack.c.bf16 %v369, %v369
        %v371 = vld [vmem:[#allocation8] sm:$0xf]
        %v372 = vld [vmem:[#allocation8 + $0x4] sm:$0xf]
        %v373 = vld [vmem:[#allocation8 + $0x8] sm:$0xf]
        %v374 = vld [vmem:[#allocation8 + $0xc] sm:$0xf]
        %v375 = vld [vmem:[#allocation8 + $0x10] sm:$0xf]
        %v376 = vld [vmem:[#allocation8 + $0x14] sm:$0xf]
        %v377 = vld [vmem:[#allocation8 + $0x18] sm:$0xf]
        %v378 = vld [vmem:[#allocation8 + $0x1c] sm:$0xf]
        %v379 = vld [vmem:[#allocation8 + $0x20] sm:$0xf]
        %v380 = vld [vmem:[#allocation8 + $0x24] sm:$0xf]
        %v381 = vld [vmem:[#allocation8 + $0x28] sm:$0xf]
        %v382 = vld [vmem:[#allocation8 + $0x2c] sm:$0xf]
        %v383 = vld [vmem:[#allocation8 + $0x30] sm:$0xf]
        %v384 = vld [vmem:[#allocation8 + $0x34] sm:$0xf]
        %v385 = vld [vmem:[#allocation8 + $0x38] sm:$0xf]
        %v386 = vld [vmem:[#allocation8 + $0x3c] sm:$0xf]
        %v387 = vld [vmem:[%s4] sm:$0x1]
        %v389 = vperm.slane %v387, 0
        %v407 = vunpack.c.l.b16 %v371
        %v408 = vunpack.c.l.b16 %v372
        %v409 = vunpack.c.l.b16 %v373
        %v410 = vunpack.c.l.b16 %v374
        %v411 = vunpack.c.l.b16 %v375
        %v412 = vunpack.c.l.b16 %v376
        %v413 = vunpack.c.l.b16 %v377
        %v414 = vunpack.c.l.b16 %v378
        %v415 = vunpack.c.l.b16 %v379
        %v416 = vunpack.c.l.b16 %v380
        %v417 = vunpack.c.l.b16 %v381
        %v418 = vunpack.c.l.b16 %v382
        %v419 = vunpack.c.l.b16 %v383
        %v420 = vunpack.c.l.b16 %v384
        %v421 = vunpack.c.l.b16 %v385
        %v422 = vunpack.c.l.b16 %v386
        %v423 = vpack.c.b16 %v408, %v407
        %v424 = vpack.c.b16 %v410, %v409
        %v425 = vpack.c.b16 %v412, %v411
        %v426 = vpack.c.b16 %v414, %v413
        %v427 = vpack.c.b16 %v416, %v415
        %v428 = vpack.c.b16 %v418, %v417
        %v429 = vpack.c.b16 %v420, %v419
        %v430 = vpack.c.b16 %v422, %v421
        %439 = vmatpush.bf16.msra.mxu0 %v430
        %440 = vmatpush.bf16.msra.mxu0 %v429
        %441 = vmatpush.bf16.msra.mxu0 %v428
        %442 = vmatpush.bf16.msra.mxu0 %v427
        %443 = vmatpush.bf16.msra.mxu0 %v426
        %444 = vmatpush.bf16.msra.mxu0 %v425
        %445 = vmatpush.bf16.msra.mxu0 %v424
        %446 = vmatpush.bf16.msra.mxu0 %v423
        %447 = vmatmul.bf16.gmra.mxu0 %v370
        %v448 = vpop.f32.mrf.mxu0
        %v449 = vadd.f32 %v389, %v448
        %v450 = vpop.f32.mrf.mxu0
        %451 = vdwg.mxu0
        %v452 = vmax.f32 %v449, 0.0
        %v453 = vld [vmem:[%s5] sm:$0x1]
        %v454 = vpack.c.bf16 %v452, %v452
        %v455 = vld [vmem:[#allocation2] sm:$0x1]
        %457 = vset.pattern.permute.xlu0 0
        %458 = vperm.xlu0 %457, %v455
        %v459 = vpop.permute.xlu0 %458
        %v461 = vperm.slane %v459, 0
        %462 = vmatpush.bf16.xpose.msra.mxu0 0
        %463 = vmatpush.bf16.xpose.msra.mxu0 0
        %464 = vmatpush.bf16.xpose.msra.mxu0 0
        %465 = vmatpush.bf16.xpose.msra.mxu0 0
        %466 = vmatpush.bf16.xpose.msra.mxu0 0
        %467 = vmatpush.bf16.xpose.msra.mxu0 0
        %468 = vmatpush.bf16.xpose.msra.mxu0 0
        %469 = vmatpush.bf16.xpose.msra.mxu0 %v454
        %470 = vmatmul.bf16.gmra.mxu0 %v453
        %v471 = vpop.f32.mrf.mxu0
        %v472 = vadd.f32 %v461, %v471
        %v473 = vpop.f32.mrf.mxu0
        %474 = vdwg.mxu0
        %vm475 = vcmask 57344
        %476 = vst.msk [vmem:[%s329] sm:$0x1] %vm475, %v472
        %s477 = sand.u32 %s187, 1
        %s478 = scalar_lea.sflag [#allocation5], %s477
        %s479 = sand.u32 %s187, 1
        %s480 = scalar_lea.vmem [#allocation9], %s479
        // Predicated region
        $region61: #{tpu_custom_call.1} parent=47 // pred_check
          %p481 = pneg %p197
        $region62: #{tpu_custom_call.1} parent=47 // pred_check_branch
          %483 = sbr.rel (%p481) target = $region64
        $region63: #{tpu_custom_call.1} parent=47 // pred_region
          %485 = vsyncadd %s478, 0
          %s486 = scalar_lea.hbm %s7, %s27
          %s488 = sshll.u32 %s480, 4
          %s489 = int_to_ptr.vmem [resolvable:$true] %s488
          %s490 = sshll.u32 %s486, 4
          %s491 = int_to_ptr.hbm [resolvable:$true] %s490
          %493 = dma.vmem_to_hbm [thread:$0]  %s489, 16, %s491, %s478
        $region64: #{tpu_custom_call.1} parent=47 // pred_fallthru
          _
      $region48: #{tpu_custom_call.1} parent=5 // pred_fallthru
        _
      %p494 = scmp.le.s32.totalorder 2, %s22
      // Predicated region
      $region65: #{tpu_custom_call.1} parent=5 // pred_check
        %p495 = pneg %p494
      $region66: #{tpu_custom_call.1} parent=5 // pred_check_branch
        %497 = sbr.rel (%p495) target = $region68
      $region67: #{tpu_custom_call.1} parent=5 // pred_region
        %s498 = ssub.s32 %s22, 2
        // Predicated region
        $region69: #{tpu_custom_call.1} parent=67 // pred_check
          %p499 = pneg %p203
        $region70: #{tpu_custom_call.1} parent=67 // pred_check_branch
          %501 = sbr.rel (%p499) target = $region72
        $region71: #{tpu_custom_call.1} parent=67 // pred_region
          %s502 = sand.u32 %s188, 1
          %s503 = scalar_lea.sflag [#allocation5], %s502
          %s504 = sand.u32 %s188, 1
          %s505 = scalar_lea.vmem [#allocation9], %s504
          %507 = dma.done %s503, 16
        $region72: #{tpu_custom_call.1} parent=67 // pred_fallthru
          _
      $region68: #{tpu_custom_call.1} parent=5 // pred_fallthru
        _
    $region6: #{tpu_custom_call.1} parent=1 // loop_footer
      %s26 = sadd.s32 1, %s22
    $region7: #{tpu_custom_call.1} parent=1 // loop_footer_branch
      %21 = sbr.rel target = $region3
    $region8: #{tpu_custom_call.1} parent=1 // loop_exit
      _
    %508 = vsyncpa [#allocation4], 1
    %s509 = scalar_lea.sflag [#allocation4], 1
    %510 = vsyncpa %s509, 1
    %511 = vsyncpa [#allocation7], 1
    %512 = vsyncpa [#allocation5], 1
    %s513 = scalar_lea.sflag [#allocation5], 1
    %514 = vsyncpa %s513, 1

</llo_original>
